<compile_context>
chip_gen: v7x
topology: tpu7x:2x2x1
jax: 0.10.0
libtpu: 0.0.40
codegen_flags: <defaults>
</compile_context>

<pallas_src>
import functools

import jax
import jax.numpy as jnp
from jax.experimental import pallas as pl
from jax.experimental.pallas import tpu as pltpu


def _rmsnorm_kernel(x_ref, scale_ref, o_ref, *, eps, inv_dim, chunk, n_chunks,
                    mask_lanes, dim):
    # x_ref/o_ref: (TR, dim) tiles; scale_ref: (1, dim) fp32, VMEM-resident.
    scale = scale_ref[...]

    def normalize(r0):
        x = x_ref[pl.ds(r0, chunk), :].astype(jnp.float32)      # fp32 compute
        if mask_lanes:
            # dim % 128 != 0: zero physical padding lanes so they cannot leak
            # into the reduction (defensive; logical lanes are already < dim).
            lane = jax.lax.broadcasted_iota(jnp.int32, x.shape, 1)
            x = jnp.where(lane < dim, x, 0.0)
        # mean-of-squares uses the true dim as denominator.
        ms = jnp.sum(x * x, axis=-1, keepdims=True) * inv_dim
        inv_rms = jax.lax.rsqrt(ms + eps)
        o_ref[pl.ds(r0, chunk), :] = (x * inv_rms * scale).astype(o_ref.dtype)

    if n_chunks == 1:
        normalize(0)
    else:
        def body(c, carry):
            normalize(pl.multiple_of(c * chunk, chunk))
            return carry
        jax.lax.fori_loop(0, n_chunks, body, None)


def _align_down(a, b):
    return (a // b) * b


def _round_up(a, b):
    return ((a + b - 1) // b) * b


def rms_norm(x, scale, eps=1e-6, *, max_block_rows=2048):
    """RMSNorm over the last axis of x, matching torch F.rms_norm semantics."""
    orig_shape = x.shape
    dim = orig_shape[-1]
    assert scale.shape == (dim,)

    x2d = x.reshape(-1, dim)
    rows = x2d.shape[0]

    itemsize = jnp.dtype(x.dtype).itemsize
    # Sublane packing: 8 rows/vreg for 32-bit, 16 for 16-bit, 32 for 8-bit.
    sublane = {4: 8, 2: 16, 1: 32}.get(itemsize, 8)

    # --- Generation-aware VMEM sizing (v5e/v6e: 128 MiB; v7x: 64 MiB per TC).
    try:
        vmem_cap = pltpu.get_tpu_info().vmem_capacity_bytes
    except Exception:
        vmem_cap = 64 * 1024 * 1024          # conservative (v7x-safe) fallback
    budget = (vmem_cap * 3) // 8             # ~37.5% working budget
    vmem_limit = (vmem_cap * 3) // 4         # ~75% scoped limit

    # --- fp32-intermediate sub-chunk: cap its footprint at ~1/3 of the budget.
    chunk = min(256, max(_align_down(budget // 3 // max(dim * 16, 1), sublane),
                         sublane))

    # --- Row tile sized by the double-buffered in/out DMA tiles only.
    bytes_per_row = dim * 4 * itemsize                     # 2x in + 2x out bufs
    fixed = chunk * dim * 16 + dim * 8                     # fp32 temps + scale
    tr = max((budget - fixed) // bytes_per_row, sublane)
    tr = min(tr, max_block_rows, _round_up(rows, sublane))
    tr = max(_align_down(tr, sublane), sublane)

    # --- Keep >=4 grid steps when possible (pipelining overlap + v7x 2-TC
    #     split), but never shrink the DMA tile below ~256 rows.
    min_tr = max(min(256, tr), sublane)
    while pl.cdiv(rows, tr) < 4 and tr > min_tr:
        tr = max(_align_down(tr // 2, sublane), min_tr)

    # Sub-chunk must divide the row tile.
    if tr > chunk:
        tr = _align_down(tr, chunk)
    else:
        chunk = tr
    n_chunks = tr // chunk

    grid = (pl.cdiv(rows, tr),)              # ragged last block handled by Pallas

    # scale: pre-cast to fp32, kept VMEM-resident via a (1, dim) block.
    scale2d = scale.astype(jnp.float32).reshape(1, dim)

    kernel = functools.partial(
        _rmsnorm_kernel,
        eps=float(eps),
        inv_dim=1.0 / float(dim),
        chunk=chunk,
        n_chunks=n_chunks,
        mask_lanes=(dim % 128 != 0),
        dim=dim,
    )

    cost = pl.CostEstimate(
        flops=3 * rows * dim,
        transcendentals=rows,
        bytes_accessed=2 * rows * dim * itemsize + dim * 4,
    )

    out = pl.pallas_call(
        kernel,
        out_shape=jax.ShapeDtypeStruct((rows, dim), x.dtype),
        grid_spec=pltpu.PrefetchScalarGridSpec(
            num_scalar_prefetch=0,
            grid=grid,
            in_specs=[
                pl.BlockSpec((tr, dim), lambda i: (i, 0)),   # x tile
                pl.BlockSpec((1, dim), lambda i: (0, 0)),    # scale (resident)
            ],
            out_specs=pl.BlockSpec((tr, dim), lambda i: (i, 0)),
        ),
        compiler_params=pltpu.CompilerParams(
            dimension_semantics=("parallel",),   # v7x: shards grid across 2 TCs
            vmem_limit_bytes=int(vmem_limit),
        ),
        cost_estimate=cost,
    )(x2d, scale2d)

    return out.reshape(orig_shape)


if __name__ == "__main__":
    key = jax.random.PRNGKey(0)
    batch, seq, hidden = 2, 8, 32

    # Deterministic inputs; bf16 input exercises the fp32-compute / cast-back path.
    x = jax.random.normal(key, (batch, seq, hidden), dtype=jnp.float32).astype(jnp.bfloat16)
    # Parameter: scale initialized to ones (as in nn.Parameter(torch.ones(dim))).
    scale = jnp.ones((hidden,), dtype=jnp.float32)

    y = rms_norm(x, scale, eps=1e-6)
    jax.block_until_ready(y)

    # Sanity check against a pure-JAX reference of the same math.
    xf = x.astype(jnp.float32)
    ref = (xf * jax.lax.rsqrt(jnp.mean(xf * xf, axis=-1, keepdims=True) + 1e-6)
           * scale).astype(x.dtype)
    assert y.shape == x.shape and y.dtype == x.dtype
    assert jnp.allclose(y.astype(jnp.float32), ref.astype(jnp.float32), atol=1e-2, rtol=1e-2)

    print("KERNEL_OK")
</pallas_src>

<mosaic_0001>
module attributes {stable_mosaic.version = 11 : i64} {
  func.func @_rmsnorm_kernel(%arg0: i32, %arg1: memref<16x32xbf16, #tpu.memory_space<vmem>>, %arg2: memref<1x32xf32, #tpu.memory_space<vmem>>, %arg3: memref<16x32xbf16, #tpu.memory_space<vmem>>) attributes {dimension_semantics = [#tpu.dimension_semantics<parallel>], iteration_bounds = array<i64: 1>, scalar_prefetch = 0 : i64, scratch_operands = 0 : i64, tpu.core_type = #tpu.core_type<tc>, window_params = [{transform_indices = @transform_0, window_bounds = array<i64: 16, 32>}, {pipeline_mode = #tpu.pipeline_mode<synchronous>, transform_indices = @transform_1, window_bounds = array<i64: 1, 32>}, {transform_indices = @transform_2, window_bounds = array<i64: 16, 32>}]} {
    %c0 = arith.constant 0 : index
    %c0_0 = arith.constant 0 : index
    %0 = vector.load %arg2[%c0, %c0_0] : memref<1x32xf32, #tpu.memory_space<vmem>>, vector<1x32xf32>
    %c0_1 = arith.constant 0 : index
    %c0_2 = arith.constant 0 : index
    %1 = vector.load %arg1[%c0_1, %c0_2] : memref<16x32xbf16, #tpu.memory_space<vmem>>, vector<16x32xbf16>
    %2 = arith.extf %1 : vector<16x32xbf16> to vector<16x32xf32>
    %3 = tpu.iota {dimensions = array<i32: 1>} : vector<16x32xi32>
    %c32_i32 = arith.constant 32 : i32
    %4 = vector.broadcast %c32_i32 : i32 to vector<16x32xi32>
    %5 = arith.cmpi slt, %3, %4 : vector<16x32xi32>
    %cst = arith.constant 0.000000e+00 : f32
    %6 = vector.broadcast %cst : f32 to vector<16x32xf32>
    %7 = arith.select %5, %2, %6 : vector<16x32xi1>, vector<16x32xf32>
    %8 = arith.mulf %7, %7 : vector<16x32xf32>
    %cst_3 = arith.constant dense<0.000000e+00> : vector<16xf32>
    %9 = vector.multi_reduction <add>, %8, %cst_3 [1] : vector<16x32xf32> to vector<16xf32>
    %10 = vector.shape_cast %9 : vector<16xf32> to vector<16x1xf32>
    %cst_4 = arith.constant 3.125000e-02 : f32
    %11 = vector.broadcast %cst_4 : f32 to vector<16x1xf32>
    %12 = arith.mulf %10, %11 : vector<16x1xf32>
    %cst_5 = arith.constant 9.99999997E-7 : f32
    %13 = vector.broadcast %cst_5 : f32 to vector<16x1xf32>
    %14 = arith.addf %12, %13 : vector<16x1xf32>
    %15 = math.rsqrt %14 : vector<16x1xf32>
    %16 = vector.broadcast %15 : vector<16x1xf32> to vector<16x32xf32>
    %17 = arith.mulf %7, %16 : vector<16x32xf32>
    %18 = vector.broadcast %0 : vector<1x32xf32> to vector<16x32xf32>
    %19 = arith.mulf %17, %18 : vector<16x32xf32>
    %20 = arith.truncf %19 : vector<16x32xf32> to vector<16x32xbf16>
    %c0_6 = arith.constant 0 : index
    %c0_7 = arith.constant 0 : index
    %21 = vector.load %arg3[%c0_6, %c0_7] : memref<16x32xbf16, #tpu.memory_space<vmem>>, vector<16x32xbf16>
    tpu.vector_store %arg3[%c0_6, %c0_7], %20 {strides = array<i32>} : memref<16x32xbf16, #tpu.memory_space<vmem>>, vector<16x32xbf16>,
    return
  }
  func.func @transform_0(%arg0: i32) -> (i32, i32) {
    %c0_i32 = arith.constant 0 : i32
    %c0_i32_0 = arith.constant 0 : i32
    return %arg0, %c0_i32 : i32, i32
  }
  func.func @transform_1(%arg0: i32) -> (i32, i32) {
    %c0_i32 = arith.constant 0 : i32
    %c0_i32_0 = arith.constant 0 : i32
    %c0_i32_1 = arith.constant 0 : i32
    return %c0_i32, %c0_i32_0 : i32, i32
  }
  func.func @transform_2(%arg0: i32) -> (i32, i32) {
    %c0_i32 = arith.constant 0 : i32
    %c0_i32_0 = arith.constant 0 : i32
    return %arg0, %c0_i32 : i32, i32
  }
}

</mosaic_0001>

<llo_original>
// kernel: tpu_custom_call.1
$region0: #{tpu_custom_call.1}
  #allocation0 [shape = 'u32[]', space=smem, size = 0x4, offset = 0x4, fixed_abs, tag = 'smem constant byte address 0x4 - core index']
  #allocation1 [shape = 'u32[144,128]{1,0:T(1,128)}', space=vmem, size = 0x12000, scoped, tag = 'internal scratch']
  %s0 = inlined_call_operand.hbm [shape: bf16[16,32], index: 0, kind: input, shape index: {}]
  %s1 = inlined_call_operand.vmem [shape: f32[1,32], index: 1, kind: input, shape index: {}]
  %s2 = inlined_call_operand.hbm [shape: bf16[16,32], index: 2, kind: output, shape index: {}]
  %s3 = sld [smem:[#allocation0]]
  $region22: #{tpu_custom_call.1} parent=0
    _
  %s5 = ssub.s32 1, %s3
  %s6 = scalar_select 0, %s5, %s3
  $region1: #{tpu_custom_call.1} parent=0
    #allocation2 [shape = 'u8[4096]{0}', space=vmem, size = 0x1000, scoped, tag = 'input window, operand 0, single buffered']
    #allocation3 [shape = 's32[1]{0}', space=sflag, size = 0x4, scoped, tag = 'scoped memory for tpu_custom_call.1']
    #allocation4 [shape = 's32[1]{0}', space=sflag, size = 0x4, scoped, tag = 'scoped memory for tpu_custom_call.1']
    #allocation5 [shape = 'u8[4096]{0}', space=vmem, size = 0x1000, scoped, tag = 'output window, operand 0, single buffered']
    %7 = vsyncpa [#allocation3], 0
    %8 = vsyncpa [#allocation4], 0
    // Predicated region
    $region2: #{tpu_custom_call.1} parent=1 // pred_check
      _
    $region3: #{tpu_custom_call.1} parent=1 // pred_check_branch
      %10 = sbr.rel (0) target = $region5
    $region4: #{tpu_custom_call.1} parent=1 // pred_region
      %s12 = ssub.s32 128, 128
      %13 = vsyncadd [#allocation3], %s12
      %s14 = sshll.u32 [#allocation2], 4
      %s15 = int_to_ptr.vmem [resolvable:$true] %s14
      %20 = dma.hbm_to_vmem [thread:$0]  %s0, 128, %s15, [#allocation3], 64, 64, 4
    $region5: #{tpu_custom_call.1} parent=1 // pred_fallthru
      _
    // Predicated region
    $region6: #{tpu_custom_call.1} parent=1 // pred_check
      _
    $region7: #{tpu_custom_call.1} parent=1 // pred_check_branch
      %22 = sbr.rel (0) target = $region9
    $region8: #{tpu_custom_call.1} parent=1 // pred_region
      _
    $region9: #{tpu_custom_call.1} parent=1 // pred_fallthru
      _
    // Predicated region
    $region10: #{tpu_custom_call.1} parent=1 // pred_check
      _
    $region11: #{tpu_custom_call.1} parent=1 // pred_check_branch
      %24 = sbr.rel (0) target = $region13
    $region12: #{tpu_custom_call.1} parent=1 // pred_region
      %25 = dma.done [#allocation3], 128
    $region13: #{tpu_custom_call.1} parent=1 // pred_fallthru
      _
    %v26 = vld [vmem:[%s1] sm:$0x1]
    %v27 = vld [vmem:[#allocation2] sm:$0xf]
    %v28 = vld [vmem:[#allocation2 + $0x4] sm:$0xf]
    %v29 = vunpack.c.l.bf16 %v27
    %v30 = vunpack.c.l.bf16 %v28
    %v31 = vlaneseq
    %v32 = vand.u32 %v31, 127
    %vm33 = vcmp.lt.s32.totalorder %v32, 32
    %v34 = vsel %vm33, %v29, 0.0
    %v35 = vsel %vm33, %v30, 0.0
    %v36 = vmul.f32 %v34, %v34
    %v37 = vmul.f32 %v35, %v35
    %vm38 = vcmask 261120
    %v39 = vsel %vm38, %v36, 0.0
    %40 = vadd.xlane.f32.xlu0 %v39
    %v41 = vpop.xlane.xlu0 %40
    %v42 = vsel %vm38, %v37, 0.0
    %43 = vadd.xlane.f32.xlu0 %v42
    %v44 = vpop.xlane.xlu0 %43
    %v45 = vmul.f32 %v41, 0.03125
    %v46 = vmul.f32 %v44, 0.03125
    %v47 = vadd.f32 %v45, 1e-06
    %v48 = vadd.f32 %v46, 1e-06
    %v49 = vrsqrt.pop %v47
    %v50 = vrsqrt.pop %v48
    %v51 = vmul.f32 %v34, %v49
    %v52 = vmul.f32 %v35, %v50
    %v54 = vlaneseq
    %v55 = vshrl.u32 %v54, 7
    %v56 = vsub.s32 0, %v55
    %v57 = vrot.slane %v26, %v56
    %v59 = vmul.f32 %v51, %v57
    %v60 = vmul.f32 %v52, %v57
    %v61 = vpack.c.bf16 %v60, %v59
    %v63 = vunpack.c.l.b16 %v61
    %v64 = vunpack.c.h.b16 %v61
    %v65 = vpack.c.b16 %v63, %v63
    %v66 = vpack.c.b16 %v64, %v64
    %vm69 = vcmask 257024
    %70 = vst.msk [vmem:[#allocation5] sm:$0xf] %vm69, %v65
    %71 = vst.msk [vmem:[#allocation5 + $0x4] sm:$0xf] %vm69, %v66
    // Predicated region
    $region14: #{tpu_custom_call.1} parent=1 // pred_check
      _
    $region15: #{tpu_custom_call.1} parent=1 // pred_check_branch
      %73 = sbr.rel (0) target = $region17
    $region16: #{tpu_custom_call.1} parent=1 // pred_region
      %s75 = ssub.s32 128, 128
      %76 = vsyncadd [#allocation4], %s75
      %s77 = sshll.u32 [#allocation5], 4
      %s78 = int_to_ptr.vmem [resolvable:$true] %s77
      %83 = dma.vmem_to_hbm [thread:$0]  %s78, 128, %s2, [#allocation4], 64, 64, 4
    $region17: #{tpu_custom_call.1} parent=1 // pred_fallthru
      _
    // Predicated region
    $region18: #{tpu_custom_call.1} parent=1 // pred_check
      _
    $region19: #{tpu_custom_call.1} parent=1 // pred_check_branch
      %85 = sbr.rel (0) target = $region21
    $region20: #{tpu_custom_call.1} parent=1 // pred_region
      %86 = dma.done [#allocation4], 128
    $region21: #{tpu_custom_call.1} parent=1 // pred_fallthru
      _
    %87 = vsyncpa [#allocation3], 1
    %88 = vsyncpa [#allocation4], 1

</llo_original>
